<compile_context>
chip_gen: v7x
topology: tpu7x:2x2x1
jax: 0.10.0
libtpu: 0.0.40
codegen_flags: <defaults>
</compile_context>

<pallas_src>
import jax
import jax.numpy as jnp
from jax.experimental import pallas as pl
from jax.experimental.pallas import tpu as pltpu


# ---------------------------------------------------------------------------
# Kernels (pure elementwise, HBM-bandwidth bound).
# ---------------------------------------------------------------------------
def _drop_path_kernel(scale_ref, x_ref, o_ref):
    # scale_ref: (TB, 1) float32; x_ref / o_ref: (TB, TN) in the input dtype.
    # f32 scale widens the multiply per-vreg on the otherwise idle VPU.
    o_ref[...] = (x_ref[...] * scale_ref[...]).astype(o_ref.dtype)


def _drop_path_residual_kernel(scale_ref, res_ref, x_ref, o_ref):
    # Fused `shortcut + drop_path(branch)`: 3 HBM passes instead of 5.
    o_ref[...] = (res_ref[...] + x_ref[...] * scale_ref[...]).astype(o_ref.dtype)


# ---------------------------------------------------------------------------
# Tiling policy.
# ---------------------------------------------------------------------------
_BYPASS_BYTES = 256 << 10   # below this, a pallas_call launch is pure overhead
_MIN_BLOCKS = 4             # keep the DMA pipeline / both v7x cores busy


def _target_block_bytes():
    """Generation-aware target block size: bigger blocks where HBM is faster."""
    try:
        kind = jax.devices()[0].device_kind.lower()
    except Exception:
        kind = ""
    if "v7" in kind or "tpu7" in kind:
        return 4 << 20      # amortize ~0.35 us/step at 3.2 TB/s HBM
    if "v6" in kind:
        return 2 << 20
    return 1 << 20          # v5e & unknown: modest blocks, 16 MiB scoped VMEM


def _choose_tiles(B, ND, itemsize, target_bytes):
    """Pick (TB, TN) obeying the (8, 128) block rules, ~target_bytes per block."""
    # Lane (last) dim: take it whole if it already fits the target, otherwise a
    # large multiple of 128.  Partial edge tiles are legal: the (8,128) rule
    # applies to the block shape, not the array shape, so an unaligned ND never
    # forces a single giant block.
    if ND * itemsize <= target_bytes:
        TN = ND
    else:
        cap = (target_bytes // itemsize) // 128 * 128
        TN = max(128, min((ND // 128) * 128, cap))

    # Sublane (batch) dim: multiple of 8, or the full dim.
    rows_target = max(1, target_bytes // max(1, TN * itemsize))
    if rows_target >= B or B <= 8:
        TB = B
    else:
        TB = min((B // 8) * 8, max(8, (rows_target // 8) * 8))

    # A (1, 1) grid serializes read -> compute -> write and idles one v7x core;
    # shrink tiles until there are a few blocks to pipeline / shard.
    while pl.cdiv(B, TB) * pl.cdiv(ND, TN) < _MIN_BLOCKS:
        if TN > 128:
            TN = max(128, (TN // 2) // 128 * 128)
        elif TB > 8:
            TB = max(8, (TB // 2) // 8 * 8)
        else:
            break
    return TB, TN


# ---------------------------------------------------------------------------
# Public API.
# ---------------------------------------------------------------------------
def drop_path(x, drop_prob: float = 0.0, training: bool = False, *,
              key=None, residual=None):
    """Stochastic depth.

    If `residual` is given, returns `residual + drop_path(x)` in one fused
    pass (the way DropPath is always consumed inside residual blocks).
    """
    if drop_prob == 0.0 or not training:
        return x if residual is None else residual + x
    if drop_prob < 0.0 or drop_prob >= 1.0:
        raise ValueError(f"drop_prob must be in [0, 1), got {drop_prob}")
    if key is None:
        raise ValueError(
            "drop_path(training=True, drop_prob>0) needs an explicit PRNG key; "
            "a fixed default would reuse the same mask across layers and steps.")

    keep_prob = 1.0 - drop_prob
    B = x.shape[0]

    # One Bernoulli(keep_prob) draw per sample; survivors scaled by 1/keep_prob.
    # Kept in f32 so bf16/fp16 inputs do not inherit a rounded 1/keep_prob.
    keep = jax.random.bernoulli(key, p=keep_prob, shape=(B,))
    scale = keep.astype(jnp.float32) / jnp.float32(keep_prob)      # (B,) f32

    orig_shape = x.shape
    nd = 1
    for d in x.shape[1:]:
        nd *= d
    x2 = x.reshape(B, nd)
    scale2 = scale.reshape(B, 1)
    res2 = None
    if residual is not None:
        assert residual.shape == x.shape, "residual must match x's shape"
        res2 = residual.astype(x.dtype).reshape(B, nd)

    itemsize = jnp.dtype(x.dtype).itemsize
    total_bytes = B * nd * itemsize

    # Tiny tensors: let XLA fuse the multiply into neighbouring ops instead of
    # paying an opaque custom-call launch + pipeline warm-up.
    if total_bytes <= _BYPASS_BYTES:
        out = x2 * scale2 if res2 is None else res2 + x2 * scale2
        return out.astype(x.dtype).reshape(orig_shape)

    TB, TN = _choose_tiles(B, nd, itemsize, _target_block_bytes())
    grid = (pl.cdiv(B, TB), pl.cdiv(nd, TN))

    scale_spec = pl.BlockSpec((TB, 1), lambda i, j: (i, 0))
    data_spec = pl.BlockSpec((TB, TN), lambda i, j: (i, j))

    # VMEM budget: each big stream (x, optional residual, out) is
    # double-buffered by the auto-pipeline; add slack for internal scratch,
    # stay under v7x's 64 MiB physical VMEM.
    n_streams = 2 if res2 is None else 3
    block_bytes = TB * TN * itemsize
    vmem_limit = min(56 << 20,
                     max(16 << 20, 2 * n_streams * block_bytes + (8 << 20)))

    kernel = _drop_path_kernel if res2 is None else _drop_path_residual_kernel
    operands = (scale2, x2) if res2 is None else (scale2, res2, x2)
    in_specs = [scale_spec] + [data_spec] * (len(operands) - 1)

    # TODO(synk): skip HBM reads of all-dropped row blocks (memory_space=pl.ANY
    # + scalar-prefetched keep mask + conditional make_async_copy); with TB>=8
    # samples per block the expected saving at typical drop_prob is small.
    out = pl.pallas_call(
        kernel,
        out_shape=jax.ShapeDtypeStruct((B, nd), x.dtype),
        grid=grid,
        in_specs=in_specs,
        out_specs=data_spec,
        compiler_params=pltpu.CompilerParams(
            dimension_semantics=("parallel", "parallel"),
            vmem_limit_bytes=int(vmem_limit),
        ),
    )(*operands)
    return out.reshape(orig_shape)


class DropPath:
    """Drop paths (stochastic depth) per sample, Pallas-backed.

    `module(x, key=k, residual=shortcut)` additionally fuses the surrounding
    residual add (`shortcut + drop_path(x)`) into the same HBM pass.
    """

    def __init__(self, drop_prob=None):
        self.drop_prob = drop_prob if drop_prob is not None else 0.0
        self.training = True

    def __call__(self, x, key=None, residual=None):
        return drop_path(x, self.drop_prob, self.training,
                         key=key, residual=residual)


if __name__ == "__main__":
    root = jax.random.PRNGKey(0)
    data_key, res_key, mask_key = jax.random.split(root, 3)

    drop_prob = 0.25
    keep_prob = 1.0 - drop_prob

    # Main shape: ~1 MiB f32 -> exercises the tiled Pallas path.
    B, N, D = 8, 128, 256
    x = jax.random.normal(data_key, (B, N, D), dtype=jnp.float32)
    shortcut = jax.random.normal(res_key, (B, N, D), dtype=jnp.float32)

    module = DropPath(drop_prob=drop_prob)
    module.training = True

    # 1) Plain drop_path vs. exact reference (same Bernoulli key).
    out = jax.block_until_ready(module(x, key=mask_key))
    keep = jax.random.bernoulli(mask_key, p=keep_prob, shape=(B,))
    scale_vals = (keep.astype(jnp.float32) / keep_prob)[:, None, None]
    ref = x * scale_vals
    ok = bool(jnp.allclose(out, ref, atol=1e-6, rtol=1e-6))

    # Structural sanity: each sample either all-zero or scaled by 1/keep_prob.
    ratio = jnp.abs(out).max(axis=(1, 2)) / jnp.abs(x).max(axis=(1, 2))
    ok = ok and bool(
        jnp.all((ratio < 1e-6) | (jnp.abs(ratio - 1.0 / keep_prob) < 1e-4)))

    # 2) Fused residual-add path: shortcut + drop_path(branch).
    out_fused = jax.block_until_ready(module(x, key=mask_key, residual=shortcut))
    ok = ok and bool(jnp.allclose(out_fused, shortcut + ref, atol=1e-5, rtol=1e-5))

    # 3) Unaligned flattened trailing dim (tests the partial lane-tile path).
    B2, N2, D2 = 16, 97, 53
    x2 = jax.random.normal(data_key, (B2, N2, D2), dtype=jnp.float32)
    out2 = jax.block_until_ready(drop_path(x2, drop_prob, True, key=mask_key))
    keep2 = jax.random.bernoulli(mask_key, p=keep_prob, shape=(B2,))
    ref2 = x2 * (keep2.astype(jnp.float32) / keep_prob)[:, None, None]
    ok = ok and bool(jnp.allclose(out2, ref2, atol=1e-6, rtol=1e-6))

    # 4) Eval / drop_prob == 0 must be exact identity.
    module.training = False
    out_eval = jax.block_until_ready(module(x, key=mask_key))
    ok = ok and bool(jnp.array_equal(out_eval, x))

    if ok:
        print("KERNEL_OK")
    else:
        raise SystemExit("drop_path output failed sanity check")
</pallas_src>

<mosaic_0001>
module attributes {stable_mosaic.version = 11 : i64} {
  func.func @_drop_path_kernel(%arg0: i32, %arg1: i32, %arg2: memref<8x1xf32, #tpu.memory_space<vmem>>, %arg3: memref<8x8192xf32, #tpu.memory_space<vmem>>, %arg4: memref<8x8192xf32, #tpu.memory_space<vmem>>) attributes {dimension_semantics = [#tpu.dimension_semantics<parallel>, #tpu.dimension_semantics<parallel>], iteration_bounds = array<i64: 1, 4>, scalar_prefetch = 0 : i64, scratch_operands = 0 : i64, tpu.core_type = #tpu.core_type<tc>, window_params = [{transform_indices = @transform_0, window_bounds = array<i64: 8, 1>}, {transform_indices = @transform_1, window_bounds = array<i64: 8, 8192>}, {transform_indices = @transform_2, window_bounds = array<i64: 8, 8192>}]} {
    %c0 = arith.constant 0 : index
    %c0_0 = arith.constant 0 : index
    %0 = vector.load %arg3[%c0, %c0_0] : memref<8x8192xf32, #tpu.memory_space<vmem>>, vector<8x8192xf32>
    %c0_1 = arith.constant 0 : index
    %c0_2 = arith.constant 0 : index
    %1 = vector.load %arg2[%c0_1, %c0_2] : memref<8x1xf32, #tpu.memory_space<vmem>>, vector<8x1xf32>
    %2 = vector.broadcast %1 : vector<8x1xf32> to vector<8x8192xf32>
    %3 = arith.mulf %0, %2 : vector<8x8192xf32>
    %c0_3 = arith.constant 0 : index
    %c0_4 = arith.constant 0 : index
    %4 = vector.load %arg4[%c0_3, %c0_4] : memref<8x8192xf32, #tpu.memory_space<vmem>>, vector<8x8192xf32>
    tpu.vector_store %arg4[%c0_3, %c0_4], %3 {strides = array<i32>} : memref<8x8192xf32, #tpu.memory_space<vmem>>, vector<8x8192xf32>,
    return
  }
  func.func @transform_0(%arg0: i32, %arg1: i32) -> (i32, i32) {
    %c0_i32 = arith.constant 0 : i32
    %c0_i32_0 = arith.constant 0 : i32
    return %arg0, %c0_i32 : i32, i32
  }
  func.func @transform_1(%arg0: i32, %arg1: i32) -> (i32, i32) {
    %c0_i32 = arith.constant 0 : i32
    return %arg0, %arg1 : i32, i32
  }
  func.func @transform_2(%arg0: i32, %arg1: i32) -> (i32, i32) {
    %c0_i32 = arith.constant 0 : i32
    return %arg0, %arg1 : i32, i32
  }
}

</mosaic_0001>

<llo_original>
// kernel: tpu_custom_call.1
$region0: #{tpu_custom_call.1}
  #allocation0 [shape = 'u32[]', space=smem, size = 0x4, offset = 0x4, fixed_abs, tag = 'smem constant byte address 0x4 - core index']
  #allocation1 [shape = 'u32[144,128]{1,0:T(1,128)}', space=vmem, size = 0x12000, scoped, tag = 'internal scratch']
  %s0 = inlined_call_operand.vmem [shape: f32[8,1], index: 0, kind: input, shape index: {}]
  %s1 = inlined_call_operand.hbm [shape: f32[8,32768], index: 1, kind: input, shape index: {}]
  %s2 = inlined_call_operand.hbm [shape: f32[8,32768], index: 2, kind: output, shape index: {}]
  %s3 = sld [smem:[#allocation0]]
  $region45: #{tpu_custom_call.1} parent=0
    _
  %s5 = ssub.s32 1, %s3
  %s6 = scalar_select 0, %s5, %s3
  $region1: #{tpu_custom_call.1} parent=0
    #allocation2 [shape = 'u8[524288]{0}', space=vmem, size = 0x80000, scoped, tag = 'input window, operand 1']
    #allocation3 [shape = 's32[2]{0}', space=sflag, size = 0x8, scoped, tag = 'scoped memory for tpu_custom_call.1']
    #allocation4 [shape = 's32[2]{0}', space=sflag, size = 0x8, scoped, tag = 'scoped memory for tpu_custom_call.1']
    #allocation5 [shape = 'u8[524288]{0}', space=vmem, size = 0x80000, scoped, tag = 'output window, operand 0']
    %7 = vsyncpa [#allocation3], 0
    %s8 = scalar_lea.sflag [#allocation3], 1
    %9 = vsyncpa %s8, 0
    %10 = vsyncpa [#allocation4], 0
    %s11 = scalar_lea.sflag [#allocation4], 1
    %12 = vsyncpa %s11, 0
    loop: start=0, step=1, limit=6
    $region2: #{tpu_custom_call.1} parent=1 // loop_pre_header
      _
    $region3: #{tpu_custom_call.1} parent=1 // loop_header
      %s14 = sphi 0, %s18
      %p15 = scmp.ge.s32.totalorder %s14, 6
      %s21 = sphi 0, %s33
      %s22 = sphi 0, %s29
      %s23 = sphi 0, %s21
      %s24 = sphi 0, %s22
      %s25 = sphi 0, %s23
      %s26 = sphi 0, %s24
      %s36 = sphi 0, %s38
      %s39 = sphi 0, %s36
      %s40 = sphi 0, %s39
      %s56 = sphi 0, %s40
      %s64 = sphi 0, %s66
      %s67 = sphi 0, %s64
      %s68 = sphi 0, %s67
      %s84 = sphi 0, %s68
      %s92 = sphi 0, %s94
      %s95 = sphi 0, %s92
      %s96 = sphi 0, %s95
      %s112 = sphi 0, %s96
    $region4: #{tpu_custom_call.1} parent=1 // loop_header_branch
      %17 = sbr.rel (%p15) target = $region8
    $region5: #{tpu_custom_call.1} parent=1 // loop_body
      %s19 = ssub.s32 %s14, 1
      %s20 = ssub.s32 %s14, 2
      %s27 = sadd.s32 1, %s22
      %p28 = scmp.ge.s32.totalorder %s27, 4
      %s29 = scalar_select %p28, 0, %s27
      %s30 = sadd.s32 1, %s21
      %s31 = scalar_select %p28, %s30, %s21
      %p32 = scmp.ge.s32.totalorder %s31, 1
      %s33 = scalar_select %p32, 0, %s31
      %s34 = ssub.s32 %s21, %s33
      %p35 = scmp.eq.s32.totalorder %s34, 0
      %s37 = sadd.s32 %s36, 1
      %s38 = scalar_select %p35, %s36, %s37
      %p41 = pneg %p35
      %p42 = scmp.eq.s32.totalorder %s14, 3
      %p43 = por %p41, %p42
      %p44 = scmp.ne.s32.totalorder %s36, %s39
      %p45 = scmp.eq.s32.totalorder %s14, 0
      %p46 = por %p44, %p45
      %p47 = scmp.ne.s32.totalorder %s36, %s39
      %p48 = scmp.eq.s32.totalorder %s19, 3
      %p49 = por %p47, %p48
      %p50 = scmp.ne.s32.totalorder %s39, %s40
      %p51 = scmp.eq.s32.totalorder %s19, 0
      %p52 = por %p50, %p51
      %p53 = scmp.ne.s32.totalorder %s39, %s40
      %p54 = scmp.eq.s32.totalorder %s20, 3
      %p55 = por %p53, %p54
      %p57 = scmp.ne.s32.totalorder %s40, %s56
      %p58 = scmp.eq.s32.totalorder %s20, 0
      %p59 = por %p57, %p58
      %s60 = ssub.s32 %s21, %s33
      %s61 = ssub.s32 %s22, %s29
      %s62 = sor.u32 %s60, %s61
      %p63 = scmp.eq.s32.totalorder %s62, 0
      %s65 = sadd.s32 %s64, 1
      %s66 = scalar_select %p63, %s64, %s65
      %p69 = pneg %p63
      %p70 = scmp.eq.s32.totalorder %s14, 3
      %p71 = por %p69, %p70
      %p72 = scmp.ne.s32.totalorder %s64, %s67
      %p73 = scmp.eq.s32.totalorder %s14, 0
      %p74 = por %p72, %p73
      %p75 = scmp.ne.s32.totalorder %s64, %s67
      %p76 = scmp.eq.s32.totalorder %s19, 3
      %p77 = por %p75, %p76
      %p78 = scmp.ne.s32.totalorder %s67, %s68
      %p79 = scmp.eq.s32.totalorder %s19, 0
      %p80 = por %p78, %p79
      %p81 = scmp.ne.s32.totalorder %s67, %s68
      %p82 = scmp.eq.s32.totalorder %s20, 3
      %p83 = por %p81, %p82
      %p85 = scmp.ne.s32.totalorder %s68, %s84
      %p86 = scmp.eq.s32.totalorder %s20, 0
      %p87 = por %p85, %p86
      %s88 = ssub.s32 %s21, %s33
      %s89 = ssub.s32 %s22, %s29
      %s90 = sor.u32 %s88, %s89
      %p91 = scmp.eq.s32.totalorder %s90, 0
      %s93 = sadd.s32 %s92, 1
      %s94 = scalar_select %p91, %s92, %s93
      %p97 = pneg %p91
      %p98 = scmp.eq.s32.totalorder %s14, 3
      %p99 = por %p97, %p98
      %p100 = scmp.ne.s32.totalorder %s92, %s95
      %p101 = scmp.eq.s32.totalorder %s14, 0
      %p102 = por %p100, %p101
      %p103 = scmp.ne.s32.totalorder %s92, %s95
      %p104 = scmp.eq.s32.totalorder %s19, 3
      %p105 = por %p103, %p104
      %p106 = scmp.ne.s32.totalorder %s95, %s96
      %p107 = scmp.eq.s32.totalorder %s19, 0
      %p108 = por %p106, %p107
      %p109 = scmp.ne.s32.totalorder %s95, %s96
      %p110 = scmp.eq.s32.totalorder %s20, 3
      %p111 = por %p109, %p110
      %p113 = scmp.ne.s32.totalorder %s96, %s112
      %p114 = scmp.eq.s32.totalorder %s20, 0
      %p115 = por %p113, %p114
      %p116 = scmp.le.s32.totalorder 1, %s14
      %p117 = scmp.lt.s32.totalorder %s14, 5
      %p118 = pnand %p116, %p117
      %p119 = pneg %p118
      // Predicated region
      $region9: #{tpu_custom_call.1} parent=5 // pred_check
        _
      $region10: #{tpu_custom_call.1} parent=5 // pred_check_branch
        %121 = sbr.rel (%p118) target = $region12
      $region11: #{tpu_custom_call.1} parent=5 // pred_region
        %s122 = ssub.s32 %s14, 1
        // Predicated region
        $region13: #{tpu_custom_call.1} parent=11 // pred_check
          %p123 = pneg %p52
        $region14: #{tpu_custom_call.1} parent=11 // pred_check_branch
          %125 = sbr.rel (%p123) target = $region16
        $region15: #{tpu_custom_call.1} parent=11 // pred_region
          %p126 = scmp.lt.s32.totalorder %s23, 0
          %s127 = scalar_select %p126, %s23, 0
          %s128 = smul.addr %s127, 8
          %s129 = scalar_lea.vmem %s0, %s128
        $region16: #{tpu_custom_call.1} parent=11 // pred_fallthru
          _
      $region12: #{tpu_custom_call.1} parent=5 // pred_fallthru
        _
      %p130 = scmp.lt.s32.totalorder %s14, 4
      // Predicated region
      $region17: #{tpu_custom_call.1} parent=5 // pred_check
        %p131 = pneg %p130
      $region18: #{tpu_custom_call.1} parent=5 // pred_check_branch
        %133 = sbr.rel (%p131) target = $region20
      $region19: #{tpu_custom_call.1} parent=5 // pred_region
        // Predicated region
        $region21: #{tpu_custom_call.1} parent=19 // pred_check
          %p134 = pneg %p74
        $region22: #{tpu_custom_call.1} parent=19 // pred_check_branch
          %136 = sbr.rel (%p134) target = $region24
        $region23: #{tpu_custom_call.1} parent=19 // pred_region
          %s137 = sand.u32 %s64, 1
          %s138 = scalar_lea.sflag [#allocation3], %s137
          %s139 = sand.u32 %s64, 1
          %s140 = smul.addr %s139, 512
          %s141 = scalar_lea.vmem [#allocation2], %s140
          %s142 = smul.u32 64, %s22
          %s144 = ssub.s32 8192, 8192
          %145 = vsyncadd %s138, %s144
          %s146 = smul.addr %s21, 256
          %s147 = sadd.s32 %s142, %s146
          %s148 = smul.addr %s147, 128
          %s149 = scalar_lea.hbm %s1, %s148
          %s151 = sshll.u32 %s141, 4
          %s152 = int_to_ptr.vmem [resolvable:$true] %s151
          %154 = dma.hbm_to_vmem [thread:$0]  %s149, 8192, %s152, %s138
        $region24: #{tpu_custom_call.1} parent=19 // pred_fallthru
          _
      $region20: #{tpu_custom_call.1} parent=5 // pred_fallthru
        _
      %p155 = scmp.le.s32.totalorder 1, %s14
      %p156 = scmp.lt.s32.totalorder %s14, 5
      %p157 = pnand %p155, %p156
      %p158 = pneg %p157
      // Predicated region
      $region25: #{tpu_custom_call.1} parent=5 // pred_check
        _
      $region26: #{tpu_custom_call.1} parent=5 // pred_check_branch
        %160 = sbr.rel (%p157) target = $region28
      $region27: #{tpu_custom_call.1} parent=5 // pred_region
        %s161 = ssub.s32 %s14, 1
        %s162 = sand.u32 %s67, 1
        %s163 = scalar_lea.sflag [#allocation3], %s162
        %s164 = sand.u32 %s67, 1
        %s165 = smul.addr %s164, 512
        %s166 = scalar_lea.vmem [#allocation2], %s165
        // Predicated region
        $region29: #{tpu_custom_call.1} parent=27 // pred_check
          %p167 = pneg %p80
        $region30: #{tpu_custom_call.1} parent=27 // pred_check_branch
          %169 = sbr.rel (%p167) target = $region32
        $region31: #{tpu_custom_call.1} parent=27 // pred_region
          %170 = dma.done %s163, 8192
        $region32: #{tpu_custom_call.1} parent=27 // pred_fallthru
          _
        %p171 = scmp.lt.s32.totalorder %s23, 0
        %s172 = scalar_select %p171, %s23, 0
        %s173 = smul.addr %s172, 8
        %s174 = scalar_lea.vmem %s0, %s173
        %p175 = pneg %p52
        %p176 = pneg %p49
        %s177 = sand.u32 %s67, 1
        %s178 = scalar_lea.sflag [#allocation3], %s177
        %s179 = sand.u32 %s67, 1
        %s180 = smul.addr %s179, 512
        %s181 = scalar_lea.vmem [#allocation2], %s180
        %p182 = pneg %p80
        %p183 = pneg %p77
        %p184 = pneg %p108
        %p185 = pneg %p105
        %s186 = sand.u32 %s95, 1
        %s187 = scalar_lea.sflag [#allocation4], %s186
        %s188 = sand.u32 %s95, 1
        %s189 = smul.addr %s188, 512
        %s190 = scalar_lea.vmem [#allocation5], %s189
        %p191 = scmp.lt.s32.totalorder %s23, 0
        %s192 = scalar_select %p191, %s23, 0
        %s193 = smul.addr %s192, 8
        %s194 = scalar_lea.vmem %s0, %s193
        %s195 = smul.u32 64, %s24
        %s196 = smul.u32 64, %s24
        %v197 = vld [vmem:[%s166] sm:$0xff]
        %v198 = vld [vmem:[%s166 + $0x8] sm:$0xff]
        %v199 = vld [vmem:[%s166 + $0x10] sm:$0xff]
        %v200 = vld [vmem:[%s166 + $0x18] sm:$0xff]
        %v201 = vld [vmem:[%s166 + $0x20] sm:$0xff]
        %v202 = vld [vmem:[%s166 + $0x28] sm:$0xff]
        %v203 = vld [vmem:[%s166 + $0x30] sm:$0xff]
        %v204 = vld [vmem:[%s166 + $0x38] sm:$0xff]
        %v205 = vld [vmem:[%s166 + $0x40] sm:$0xff]
        %v206 = vld [vmem:[%s166 + $0x48] sm:$0xff]
        %v207 = vld [vmem:[%s166 + $0x50] sm:$0xff]
        %v208 = vld [vmem:[%s166 + $0x58] sm:$0xff]
        %v209 = vld [vmem:[%s166 + $0x60] sm:$0xff]
        %v210 = vld [vmem:[%s166 + $0x68] sm:$0xff]
        %v211 = vld [vmem:[%s166 + $0x70] sm:$0xff]
        %v212 = vld [vmem:[%s166 + $0x78] sm:$0xff]
        %v213 = vld [vmem:[%s166 + $0x80] sm:$0xff]
        %v214 = vld [vmem:[%s166 + $0x88] sm:$0xff]
        %v215 = vld [vmem:[%s166 + $0x90] sm:$0xff]
        %v216 = vld [vmem:[%s166 + $0x98] sm:$0xff]
        %v217 = vld [vmem:[%s166 + $0xa0] sm:$0xff]
        %v218 = vld [vmem:[%s166 + $0xa8] sm:$0xff]
        %v219 = vld [vmem:[%s166 + $0xb0] sm:$0xff]
        %v220 = vld [vmem:[%s166 + $0xb8] sm:$0xff]
        %v221 = vld [vmem:[%s166 + $0xc0] sm:$0xff]
        %v222 = vld [vmem:[%s166 + $0xc8] sm:$0xff]
        %v223 = vld [vmem:[%s166 + $0xd0] sm:$0xff]
        %v224 = vld [vmem:[%s166 + $0xd8] sm:$0xff]
        %v225 = vld [vmem:[%s166 + $0xe0] sm:$0xff]
        %v226 = vld [vmem:[%s166 + $0xe8] sm:$0xff]
        %v227 = vld [vmem:[%s166 + $0xf0] sm:$0xff]
        %v228 = vld [vmem:[%s166 + $0xf8] sm:$0xff]
        %v229 = vld [vmem:[%s166 + $0x100] sm:$0xff]
        %v230 = vld [vmem:[%s166 + $0x108] sm:$0xff]
        %v231 = vld [vmem:[%s166 + $0x110] sm:$0xff]
        %v232 = vld [vmem:[%s166 + $0x118] sm:$0xff]
        %v233 = vld [vmem:[%s166 + $0x120] sm:$0xff]
        %v234 = vld [vmem:[%s166 + $0x128] sm:$0xff]
        %v235 = vld [vmem:[%s166 + $0x130] sm:$0xff]
        %v236 = vld [vmem:[%s166 + $0x138] sm:$0xff]
        %v237 = vld [vmem:[%s166 + $0x140] sm:$0xff]
        %v238 = vld [vmem:[%s166 + $0x148] sm:$0xff]
        %v239 = vld [vmem:[%s166 + $0x150] sm:$0xff]
        %v240 = vld [vmem:[%s166 + $0x158] sm:$0xff]
        %v241 = vld [vmem:[%s166 + $0x160] sm:$0xff]
        %v242 = vld [vmem:[%s166 + $0x168] sm:$0xff]
        %v243 = vld [vmem:[%s166 + $0x170] sm:$0xff]
        %v244 = vld [vmem:[%s166 + $0x178] sm:$0xff]
        %v245 = vld [vmem:[%s166 + $0x180] sm:$0xff]
        %v246 = vld [vmem:[%s166 + $0x188] sm:$0xff]
        %v247 = vld [vmem:[%s166 + $0x190] sm:$0xff]
        %v248 = vld [vmem:[%s166 + $0x198] sm:$0xff]
        %v249 = vld [vmem:[%s166 + $0x1a0] sm:$0xff]
        %v250 = vld [vmem:[%s166 + $0x1a8] sm:$0xff]
        %v251 = vld [vmem:[%s166 + $0x1b0] sm:$0xff]
        %v252 = vld [vmem:[%s166 + $0x1b8] sm:$0xff]
        %v253 = vld [vmem:[%s166 + $0x1c0] sm:$0xff]
        %v254 = vld [vmem:[%s166 + $0x1c8] sm:$0xff]
        %v255 = vld [vmem:[%s166 + $0x1d0] sm:$0xff]
        %v256 = vld [vmem:[%s166 + $0x1d8] sm:$0xff]
        %v257 = vld [vmem:[%s166 + $0x1e0] sm:$0xff]
        %v258 = vld [vmem:[%s166 + $0x1e8] sm:$0xff]
        %v259 = vld [vmem:[%s166 + $0x1f0] sm:$0xff]
        %v260 = vld [vmem:[%s166 + $0x1f8] sm:$0xff]
        %v261 = vld [vmem:[%s194] sm:$0xff]
        %263 = vset.pattern.permute.xlu0 0
        %264 = vperm.xlu0 %263, %v261
        %v265 = vpop.permute.xlu0 %264
        %v267 = vmul.f32 %v197, %v265
        %v268 = vmul.f32 %v198, %v265
        %v269 = vmul.f32 %v199, %v265
        %v270 = vmul.f32 %v200, %v265
        %v271 = vmul.f32 %v201, %v265
        %v272 = vmul.f32 %v202, %v265
        %v273 = vmul.f32 %v203, %v265
        %v274 = vmul.f32 %v204, %v265
        %v275 = vmul.f32 %v205, %v265
        %v276 = vmul.f32 %v206, %v265
        %v277 = vmul.f32 %v207, %v265
        %v278 = vmul.f32 %v208, %v265
        %v279 = vmul.f32 %v209, %v265
        %v280 = vmul.f32 %v210, %v265
        %v281 = vmul.f32 %v211, %v265
        %v282 = vmul.f32 %v212, %v265
        %v283 = vmul.f32 %v213, %v265
        %v284 = vmul.f32 %v214, %v265
        %v285 = vmul.f32 %v215, %v265
        %v286 = vmul.f32 %v216, %v265
        %v287 = vmul.f32 %v217, %v265
        %v288 = vmul.f32 %v218, %v265
        %v289 = vmul.f32 %v219, %v265
        %v290 = vmul.f32 %v220, %v265
        %v291 = vmul.f32 %v221, %v265
        %v292 = vmul.f32 %v222, %v265
        %v293 = vmul.f32 %v223, %v265
        %v294 = vmul.f32 %v224, %v265
        %v295 = vmul.f32 %v225, %v265
        %v296 = vmul.f32 %v226, %v265
        %v297 = vmul.f32 %v227, %v265
        %v298 = vmul.f32 %v228, %v265
        %v299 = vmul.f32 %v229, %v265
        %v300 = vmul.f32 %v230, %v265
        %v301 = vmul.f32 %v231, %v265
        %v302 = vmul.f32 %v232, %v265
        %v303 = vmul.f32 %v233, %v265
        %v304 = vmul.f32 %v234, %v265
        %v305 = vmul.f32 %v235, %v265
        %v306 = vmul.f32 %v236, %v265
        %v307 = vmul.f32 %v237, %v265
        %v308 = vmul.f32 %v238, %v265
        %v309 = vmul.f32 %v239, %v265
        %v310 = vmul.f32 %v240, %v265
        %v311 = vmul.f32 %v241, %v265
        %v312 = vmul.f32 %v242, %v265
        %v313 = vmul.f32 %v243, %v265
        %v314 = vmul.f32 %v244, %v265
        %v315 = vmul.f32 %v245, %v265
        %v316 = vmul.f32 %v246, %v265
        %v317 = vmul.f32 %v247, %v265
        %v318 = vmul.f32 %v248, %v265
        %v319 = vmul.f32 %v249, %v265
        %v320 = vmul.f32 %v250, %v265
        %v321 = vmul.f32 %v251, %v265
        %v322 = vmul.f32 %v252, %v265
        %v323 = vmul.f32 %v253, %v265
        %v324 = vmul.f32 %v254, %v265
        %v325 = vmul.f32 %v255, %v265
        %v326 = vmul.f32 %v256, %v265
        %v327 = vmul.f32 %v257, %v265
        %v328 = vmul.f32 %v258, %v265
        %v329 = vmul.f32 %v259, %v265
        %v330 = vmul.f32 %v260, %v265
        %331 = vst [vmem:[%s190] sm:$0xff] %v267
        %332 = vst [vmem:[%s190 + $0x8] sm:$0xff] %v268
        %333 = vst [vmem:[%s190 + $0x10] sm:$0xff] %v269
        %334 = vst [vmem:[%s190 + $0x18] sm:$0xff] %v270
        %335 = vst [vmem:[%s190 + $0x20] sm:$0xff] %v271
        %336 = vst [vmem:[%s190 + $0x28] sm:$0xff] %v272
        %337 = vst [vmem:[%s190 + $0x30] sm:$0xff] %v273
        %338 = vst [vmem:[%s190 + $0x38] sm:$0xff] %v274
        %339 = vst [vmem:[%s190 + $0x40] sm:$0xff] %v275
        %340 = vst [vmem:[%s190 + $0x48] sm:$0xff] %v276
        %341 = vst [vmem:[%s190 + $0x50] sm:$0xff] %v277
        %342 = vst [vmem:[%s190 + $0x58] sm:$0xff] %v278
        %343 = vst [vmem:[%s190 + $0x60] sm:$0xff] %v279
        %344 = vst [vmem:[%s190 + $0x68] sm:$0xff] %v280
        %345 = vst [vmem:[%s190 + $0x70] sm:$0xff] %v281
        %346 = vst [vmem:[%s190 + $0x78] sm:$0xff] %v282
        %347 = vst [vmem:[%s190 + $0x80] sm:$0xff] %v283
        %348 = vst [vmem:[%s190 + $0x88] sm:$0xff] %v284
        %349 = vst [vmem:[%s190 + $0x90] sm:$0xff] %v285
        %350 = vst [vmem:[%s190 + $0x98] sm:$0xff] %v286
        %351 = vst [vmem:[%s190 + $0xa0] sm:$0xff] %v287
        %352 = vst [vmem:[%s190 + $0xa8] sm:$0xff] %v288
        %353 = vst [vmem:[%s190 + $0xb0] sm:$0xff] %v289
        %354 = vst [vmem:[%s190 + $0xb8] sm:$0xff] %v290
        %355 = vst [vmem:[%s190 + $0xc0] sm:$0xff] %v291
        %356 = vst [vmem:[%s190 + $0xc8] sm:$0xff] %v292
        %357 = vst [vmem:[%s190 + $0xd0] sm:$0xff] %v293
        %358 = vst [vmem:[%s190 + $0xd8] sm:$0xff] %v294
        %359 = vst [vmem:[%s190 + $0xe0] sm:$0xff] %v295
        %360 = vst [vmem:[%s190 + $0xe8] sm:$0xff] %v296
        %361 = vst [vmem:[%s190 + $0xf0] sm:$0xff] %v297
        %362 = vst [vmem:[%s190 + $0xf8] sm:$0xff] %v298
        %363 = vst [vmem:[%s190 + $0x100] sm:$0xff] %v299
        %364 = vst [vmem:[%s190 + $0x108] sm:$0xff] %v300
        %365 = vst [vmem:[%s190 + $0x110] sm:$0xff] %v301
        %366 = vst [vmem:[%s190 + $0x118] sm:$0xff] %v302
        %367 = vst [vmem:[%s190 + $0x120] sm:$0xff] %v303
        %368 = vst [vmem:[%s190 + $0x128] sm:$0xff] %v304
        %369 = vst [vmem:[%s190 + $0x130] sm:$0xff] %v305
        %370 = vst [vmem:[%s190 + $0x138] sm:$0xff] %v306
        %371 = vst [vmem:[%s190 + $0x140] sm:$0xff] %v307
        %372 = vst [vmem:[%s190 + $0x148] sm:$0xff] %v308
        %373 = vst [vmem:[%s190 + $0x150] sm:$0xff] %v309
        %374 = vst [vmem:[%s190 + $0x158] sm:$0xff] %v310
        %375 = vst [vmem:[%s190 + $0x160] sm:$0xff] %v311
        %376 = vst [vmem:[%s190 + $0x168] sm:$0xff] %v312
        %377 = vst [vmem:[%s190 + $0x170] sm:$0xff] %v313
        %378 = vst [vmem:[%s190 + $0x178] sm:$0xff] %v314
        %379 = vst [vmem:[%s190 + $0x180] sm:$0xff] %v315
        %380 = vst [vmem:[%s190 + $0x188] sm:$0xff] %v316
        %381 = vst [vmem:[%s190 + $0x190] sm:$0xff] %v317
        %382 = vst [vmem:[%s190 + $0x198] sm:$0xff] %v318
        %383 = vst [vmem:[%s190 + $0x1a0] sm:$0xff] %v319
        %384 = vst [vmem:[%s190 + $0x1a8] sm:$0xff] %v320
        %385 = vst [vmem:[%s190 + $0x1b0] sm:$0xff] %v321
        %386 = vst [vmem:[%s190 + $0x1b8] sm:$0xff] %v322
        %387 = vst [vmem:[%s190 + $0x1c0] sm:$0xff] %v323
        %388 = vst [vmem:[%s190 + $0x1c8] sm:$0xff] %v324
        %389 = vst [vmem:[%s190 + $0x1d0] sm:$0xff] %v325
        %390 = vst [vmem:[%s190 + $0x1d8] sm:$0xff] %v326
        %391 = vst [vmem:[%s190 + $0x1e0] sm:$0xff] %v327
        %392 = vst [vmem:[%s190 + $0x1e8] sm:$0xff] %v328
        %393 = vst [vmem:[%s190 + $0x1f0] sm:$0xff] %v329
        %394 = vst [vmem:[%s190 + $0x1f8] sm:$0xff] %v330
        %s395 = sand.u32 %s95, 1
        %s396 = scalar_lea.sflag [#allocation4], %s395
        %s397 = sand.u32 %s95, 1
        %s398 = smul.addr %s397, 512
        %s399 = scalar_lea.vmem [#allocation5], %s398
        // Predicated region
        $region33: #{tpu_custom_call.1} parent=27 // pred_check
          %p400 = pneg %p105
        $region34: #{tpu_custom_call.1} parent=27 // pred_check_branch
          %402 = sbr.rel (%p400) target = $region36
        $region35: #{tpu_custom_call.1} parent=27 // pred_region
          %s403 = smul.u32 64, %s24
          %s405 = ssub.s32 8192, 8192
          %406 = vsyncadd %s396, %s405
          %s407 = smul.addr %s23, 256
          %s408 = sadd.s32 %s403, %s407
          %s409 = smul.addr %s408, 128
          %s410 = scalar_lea.hbm %s2, %s409
          %s412 = sshll.u32 %s399, 4
          %s413 = int_to_ptr.vmem [resolvable:$true] %s412
          %415 = dma.vmem_to_hbm [thread:$0]  %s413, 8192, %s410, %s396
        $region36: #{tpu_custom_call.1} parent=27 // pred_fallthru
          _
      $region28: #{tpu_custom_call.1} parent=5 // pred_fallthru
        _
      %p416 = scmp.le.s32.totalorder 2, %s14
      // Predicated region
      $region37: #{tpu_custom_call.1} parent=5 // pred_check
        %p417 = pneg %p416
      $region38: #{tpu_custom_call.1} parent=5 // pred_check_branch
        %419 = sbr.rel (%p417) target = $region40
      $region39: #{tpu_custom_call.1} parent=5 // pred_region
        %s420 = ssub.s32 %s14, 2
        // Predicated region
        $region41: #{tpu_custom_call.1} parent=39 // pred_check
          %p421 = pneg %p111
        $region42: #{tpu_custom_call.1} parent=39 // pred_check_branch
          %423 = sbr.rel (%p421) target = $region44
        $region43: #{tpu_custom_call.1} parent=39 // pred_region
          %s424 = sand.u32 %s96, 1
          %s425 = scalar_lea.sflag [#allocation4], %s424
          %s426 = sand.u32 %s96, 1
          %s427 = smul.addr %s426, 512
          %s428 = scalar_lea.vmem [#allocation5], %s427
          %429 = dma.done %s425, 8192
        $region44: #{tpu_custom_call.1} parent=39 // pred_fallthru
          _
      $region40: #{tpu_custom_call.1} parent=5 // pred_fallthru
        _
    $region6: #{tpu_custom_call.1} parent=1 // loop_footer
      %s18 = sadd.s32 1, %s14
    $region7: #{tpu_custom_call.1} parent=1 // loop_footer_branch
      %13 = sbr.rel target = $region3
    $region8: #{tpu_custom_call.1} parent=1 // loop_exit
      _
    %430 = vsyncpa [#allocation3], 1
    %s431 = scalar_lea.sflag [#allocation3], 1
    %432 = vsyncpa %s431, 1
    %433 = vsyncpa [#allocation4], 1
    %s434 = scalar_lea.sflag [#allocation4], 1
    %435 = vsyncpa %s434, 1

</llo_original>
